<compile_context>
chip_gen: v7x
topology: tpu7x:2x2x1
jax: 0.10.0
libtpu: 0.0.40
codegen_flags: <defaults>
</compile_context>

<pallas_src>
import math

import jax
import jax.numpy as jnp
from jax.experimental import pallas as pl
from jax.experimental.pallas import tpu as pltpu


_LANE = 128
_TRANSCENDENTAL_ACTS = ("tanh", "sigmoid", "gelu")


def _round_up(x: int, n: int) -> int:
    return -(-x // n) * n


def _apply_activation(h, name):
    # h is f32 here (post-MXU accumulation); cheap VPU/EUP ops.
    if name == "relu":
        return jnp.maximum(h, 0.0)
    if name == "leaky_relu":
        return jnp.where(h > 0, h, 0.01 * h)
    if name == "tanh":
        return jnp.tanh(h)
    if name == "sigmoid":
        return jax.nn.sigmoid(h)
    if name == "gelu":
        return jax.nn.gelu(h)
    # TODO(synk): remaining torch activations (e.g. prelu with learned slope)
    # are not implemented.
    raise NotImplementedError(f"activation '{name}' not supported")


def _make_mlp_kernel(num_weights: int, has_bias: bool, activation: str):
    """Fused MLP kernel: h = act(h @ W_i [+ b_i]) for all but the last layer."""

    def kernel(x_ref, *refs):
        w_refs = refs[:num_weights]
        b_refs = refs[num_weights:2 * num_weights] if has_bias else ()
        o_ref = refs[-1]
        h = x_ref[...]
        for idx in range(num_weights):
            w_ref = w_refs[idx]
            # MXU matmul, f32 accumulation.
            h = jnp.dot(h, w_ref[...], preferred_element_type=jnp.float32)
            if has_bias:
                h = h + b_refs[idx][...].astype(jnp.float32)
            if idx < num_weights - 1:
                h = _apply_activation(h, activation).astype(w_ref.dtype)
        o_ref[...] = h.astype(o_ref.dtype)

    return kernel


def prepare_dense_params(weights, biases=None, compute_dtype=jnp.bfloat16):
    """One-time weight/bias preparation (keep OUT of the per-call hot path).

    weights: list of arrays in PyTorch nn.Linear layout (out_features, in_features).
    biases : optional list of (out_features,) arrays (bias=True in the module).
    Returns (prepared_weights, prepared_biases_or_None, in_dim, out_dim).
    """
    in_dim = int(weights[0].shape[1])
    out_dim = int(weights[-1].shape[0])
    prep_w, prep_b = [], []
    for li, w in enumerate(weights):
        o_f, i_f = int(w.shape[0]), int(w.shape[1])
        wt = jnp.transpose(w)  # (in_features, out_features)
        i_p, o_p = _round_up(i_f, _LANE), _round_up(o_f, _LANE)
        if (i_p, o_p) != (i_f, o_f):
            wt = jnp.pad(wt, ((0, i_p - i_f), (0, o_p - o_f)))
        prep_w.append(wt.astype(compute_dtype))
        if biases is not None:
            b = biases[li].reshape(1, o_f)
            if o_p != o_f:
                b = jnp.pad(b, ((0, 0), (0, o_p - o_f)))
            prep_b.append(b.astype(compute_dtype))
    return prep_w, (prep_b if biases is not None else None), in_dim, out_dim


def dense_forward(x, params, *, activation="relu", tile_m=512):
    """Run the fused Dense MLP on an input of shape (..., in_dim)."""
    wts, bss, in_dim, out_dim = params
    assert x.shape[-1] == in_dim, (x.shape, in_dim)
    num_w = len(wts)
    has_bias = bss is not None
    in_p = int(wts[0].shape[0])
    out_p = int(wts[-1].shape[1])
    compute_dtype = wts[0].dtype
    out_dtype = x.dtype

    lead = x.shape[:-1]
    m = math.prod(lead) if lead else 1
    x2d = x.reshape(m, in_dim).astype(compute_dtype)
    if in_p != in_dim:
        # Only needed when in_dim is not lane-aligned (one HBM copy of x);
        # padding must be zeros so the zero weight rows see finite values.
        x2d = jnp.pad(x2d, ((0, 0), (0, in_p - in_dim)))

    # Row tile: large (>=128 preferred) for MXU / roofline efficiency, clamped
    # for tiny M.  bf16 needs a sublane tile of at least 16.
    min_rows = 16 if jnp.dtype(compute_dtype).itemsize < 4 else 8
    tile_m = max(min_rows, min(tile_m, _round_up(m, min_rows)))
    grid = (pl.cdiv(m, tile_m),)

    # Advisory cost estimate so XLA schedules around the custom call sensibly.
    flops = 2 * m * sum(int(w.shape[0]) * int(w.shape[1]) for w in wts)
    transcendentals = 0
    if activation in _TRANSCENDENTAL_ACTS:
        transcendentals = m * sum(int(w.shape[1]) for w in wts[:-1])
    bytes_accessed = (
        x2d.size * x2d.dtype.itemsize
        + sum(w.size * w.dtype.itemsize for w in wts)
        + (sum(b.size * b.dtype.itemsize for b in bss) if has_bias else 0)
        + m * out_p * jnp.dtype(out_dtype).itemsize)

    # VMEM budget: double-buffered x/out tiles + resident weight/bias blocks
    # (x2 for the default double buffering even though their block is fixed).
    weight_bytes = sum(w.size * w.dtype.itemsize for w in wts)
    if has_bias:
        weight_bytes += sum(b.size * b.dtype.itemsize for b in bss)
    vmem_est = (2 * tile_m * in_p * jnp.dtype(compute_dtype).itemsize
                + 2 * tile_m * out_p * jnp.dtype(out_dtype).itemsize
                + 2 * weight_bytes)
    vmem_limit = int(min(64 * 1024 * 1024, max(32 * 1024 * 1024, 2 * vmem_est)))

    in_specs = [pl.BlockSpec((tile_m, in_p), lambda i: (i, 0))]
    # Weight / bias blocks are grid-invariant: Pallas DMAs them once and keeps
    # them resident across all row tiles.
    in_specs += [pl.BlockSpec(w.shape, lambda i: (0, 0)) for w in wts]
    args = [x2d, *wts]
    if has_bias:
        in_specs += [pl.BlockSpec(b.shape, lambda i: (0, 0)) for b in bss]
        args += list(bss)

    out2d = pl.pallas_call(
        _make_mlp_kernel(num_w, has_bias, activation),
        out_shape=jax.ShapeDtypeStruct((m, out_p), out_dtype),
        grid_spec=pltpu.PrefetchScalarGridSpec(
            num_scalar_prefetch=0,
            grid=grid,
            in_specs=in_specs,
            out_specs=pl.BlockSpec((tile_m, out_p), lambda i: (i, 0)),
        ),
        compiler_params=pltpu.CompilerParams(
            dimension_semantics=("parallel",),
            vmem_limit_bytes=vmem_limit,
        ),
        cost_estimate=pl.CostEstimate(
            flops=flops, transcendentals=transcendentals,
            bytes_accessed=bytes_accessed),
    )(*args)

    if out_p != out_dim:
        out2d = out2d[:, :out_dim]
    return out2d.reshape(*lead, out_dim)


def make_dense_params(key, in_dim, out_dim, layers=2, hidden_layers=None,
                      bias=False, dtype=jnp.float32):
    """Deterministic weights matching the module's nn.Linear stack
    (PyTorch layout: weight (out_features, in_features), bias (out_features,))."""
    if hidden_layers is None:
        hidden_layers = [out_dim] * layers
    sizes = []
    last = in_dim
    for h in hidden_layers:
        sizes.append((h, last))
        last = h
    sizes.append((out_dim, last))
    weights, biases = [], []
    for shape in sizes:
        key, kw, kb = jax.random.split(key, 3)
        bound = 1.0 / (shape[1] ** 0.5)
        weights.append(jax.random.uniform(kw, shape, dtype=dtype,
                                          minval=-bound, maxval=bound))
        if bias:
            biases.append(jax.random.uniform(kb, (shape[0],), dtype=dtype,
                                             minval=-bound, maxval=bound))
    return weights, (biases if bias else None)


def _reference_forward_f32(x, weights, biases=None):
    h = x.astype(jnp.float32)
    n = len(weights)
    for i, w in enumerate(weights):
        h = h @ w.T.astype(jnp.float32)
        if biases is not None:
            h = h + biases[i].astype(jnp.float32)
        if i < n - 1:
            h = jnp.maximum(h, 0.0)
    return h


def _reference_forward_bf16(x, weights, biases=None, compute_dtype=jnp.bfloat16):
    """Matches the kernel's numerics: bf16 operands, f32 accumulation."""
    h = x.astype(compute_dtype)
    n = len(weights)
    for i, w in enumerate(weights):
        h = jnp.dot(h, w.T.astype(compute_dtype),
                    preferred_element_type=jnp.float32)
        if biases is not None:
            h = h + biases[i].astype(compute_dtype).astype(jnp.float32)
        if i < n - 1:
            h = jnp.maximum(h, 0.0).astype(compute_dtype)
    return h


if __name__ == "__main__":
    key = jax.random.PRNGKey(0)
    k_x1, k_w1, k_x2, k_w2 = jax.random.split(key, 4)

    # Case 1: lane-aligned dims, module defaults (bias=False, relu), ragged M:
    # m = 4*96 = 384 rows, tile_m = 256 -> 2 grid steps, last one partial.
    in_dim, out_dim = 128, 128
    x1 = jax.random.normal(k_x1, (4, 96, in_dim), dtype=jnp.float32)
    w1, b1 = make_dense_params(k_w1, in_dim, out_dim, layers=2, bias=False)
    params1 = prepare_dense_params(w1, b1)            # one-time prep
    y1 = jax.block_until_ready(dense_forward(x1, params1, tile_m=256))
    assert y1.shape == (4, 96, out_dim)
    assert jnp.allclose(y1, _reference_forward_bf16(x1, w1, b1),
                        atol=1e-3, rtol=1e-3)
    assert jnp.allclose(y1, _reference_forward_f32(x1, w1, b1),
                        atol=5e-2, rtol=5e-2)

    # Case 2: small, non-128-aligned dims with bias=True (exercises the
    # zero-padding path and the fused bias add).
    in2, out2 = 48, 32
    x2 = jax.random.normal(k_x2, (2, 8, in2), dtype=jnp.float32)
    w2, b2 = make_dense_params(k_w2, in2, out2, layers=2, bias=True)
    params2 = prepare_dense_params(w2, b2)
    y2 = jax.block_until_ready(dense_forward(x2, params2))
    assert y2.shape == (2, 8, out2)
    assert jnp.allclose(y2, _reference_forward_bf16(x2, w2, b2),
                        atol=1e-3, rtol=1e-3)
    assert jnp.allclose(y2, _reference_forward_f32(x2, w2, b2),
                        atol=5e-2, rtol=5e-2)

    print("KERNEL_OK")
</pallas_src>

<mosaic_0001>
module attributes {stable_mosaic.version = 11 : i64} {
  func.func @kernel(%arg0: i32, %arg1: memref<256x128xbf16, #tpu.memory_space<vmem>>, %arg2: memref<128x128xbf16, #tpu.memory_space<vmem>>, %arg3: memref<128x128xbf16, #tpu.memory_space<vmem>>, %arg4: memref<128x128xbf16, #tpu.memory_space<vmem>>, %arg5: memref<256x128xf32, #tpu.memory_space<vmem>>) attributes {dimension_semantics = [#tpu.dimension_semantics<parallel>], iteration_bounds = array<i64: 2>, scalar_prefetch = 0 : i64, scratch_operands = 0 : i64, tpu.core_type = #tpu.core_type<tc>, window_params = [{transform_indices = @transform_0, window_bounds = array<i64: 256, 128>}, {pipeline_mode = #tpu.pipeline_mode<synchronous>, transform_indices = @transform_1, window_bounds = array<i64: 128, 128>}, {pipeline_mode = #tpu.pipeline_mode<synchronous>, transform_indices = @transform_2, window_bounds = array<i64: 128, 128>}, {pipeline_mode = #tpu.pipeline_mode<synchronous>, transform_indices = @transform_3, window_bounds = array<i64: 128, 128>}, {transform_indices = @transform_4, window_bounds = array<i64: 256, 128>}]} {
    %c0 = arith.constant 0 : index
    %c0_0 = arith.constant 0 : index
    %0 = vector.load %arg1[%c0, %c0_0] : memref<256x128xbf16, #tpu.memory_space<vmem>>, vector<256x128xbf16>
    %c0_1 = arith.constant 0 : index
    %c0_2 = arith.constant 0 : index
    %1 = vector.load %arg2[%c0_1, %c0_2] : memref<128x128xbf16, #tpu.memory_space<vmem>>, vector<128x128xbf16>
    %cst = arith.constant dense<0.000000e+00> : vector<256x128xf32>
    %2 = tpu.matmul %0, %1, %cst {dimension_numbers = #tpu.dot_dimension_numbers<[1], [0], [0], [1], [0, 0, 1, 1], [], []>} : vector<256x128xbf16>, vector<128x128xbf16>, vector<256x128xf32> -> vector<256x128xf32>
    %cst_3 = arith.constant 0.000000e+00 : f32
    %3 = vector.broadcast %cst_3 : f32 to vector<256x128xf32>
    %4 = arith.maximumf %2, %3 : vector<256x128xf32>
    %5 = arith.truncf %4 : vector<256x128xf32> to vector<256x128xbf16>
    %c0_4 = arith.constant 0 : index
    %c0_5 = arith.constant 0 : index
    %6 = vector.load %arg3[%c0_4, %c0_5] : memref<128x128xbf16, #tpu.memory_space<vmem>>, vector<128x128xbf16>
    %cst_6 = arith.constant dense<0.000000e+00> : vector<256x128xf32>
    %7 = tpu.matmul %5, %6, %cst_6 {dimension_numbers = #tpu.dot_dimension_numbers<[1], [0], [0], [1], [0, 0, 1, 1], [], []>} : vector<256x128xbf16>, vector<128x128xbf16>, vector<256x128xf32> -> vector<256x128xf32>
    %cst_7 = arith.constant 0.000000e+00 : f32
    %8 = vector.broadcast %cst_7 : f32 to vector<256x128xf32>
    %9 = arith.maximumf %7, %8 : vector<256x128xf32>
    %10 = arith.truncf %9 : vector<256x128xf32> to vector<256x128xbf16>
    %c0_8 = arith.constant 0 : index
    %c0_9 = arith.constant 0 : index
    %11 = vector.load %arg4[%c0_8, %c0_9] : memref<128x128xbf16, #tpu.memory_space<vmem>>, vector<128x128xbf16>
    %cst_10 = arith.constant dense<0.000000e+00> : vector<256x128xf32>
    %12 = tpu.matmul %10, %11, %cst_10 {dimension_numbers = #tpu.dot_dimension_numbers<[1], [0], [0], [1], [0, 0, 1, 1], [], []>} : vector<256x128xbf16>, vector<128x128xbf16>, vector<256x128xf32> -> vector<256x128xf32>
    %c0_11 = arith.constant 0 : index
    %c0_12 = arith.constant 0 : index
    %13 = vector.load %arg5[%c0_11, %c0_12] : memref<256x128xf32, #tpu.memory_space<vmem>>, vector<256x128xf32>
    tpu.vector_store %arg5[%c0_11, %c0_12], %12 {strides = array<i32>} : memref<256x128xf32, #tpu.memory_space<vmem>>, vector<256x128xf32>,
    return
  }
  func.func @transform_0(%arg0: i32) -> (i32, i32) {
    %c0_i32 = arith.constant 0 : i32
    %c0_i32_0 = arith.constant 0 : i32
    return %arg0, %c0_i32 : i32, i32
  }
  func.func @transform_1(%arg0: i32) -> (i32, i32) {
    %c0_i32 = arith.constant 0 : i32
    %c0_i32_0 = arith.constant 0 : i32
    %c0_i32_1 = arith.constant 0 : i32
    return %c0_i32, %c0_i32_0 : i32, i32
  }
  func.func @transform_2(%arg0: i32) -> (i32, i32) {
    %c0_i32 = arith.constant 0 : i32
    %c0_i32_0 = arith.constant 0 : i32
    %c0_i32_1 = arith.constant 0 : i32
    return %c0_i32, %c0_i32_0 : i32, i32
  }
  func.func @transform_3(%arg0: i32) -> (i32, i32) {
    %c0_i32 = arith.constant 0 : i32
    %c0_i32_0 = arith.constant 0 : i32
    %c0_i32_1 = arith.constant 0 : i32
    return %c0_i32, %c0_i32_0 : i32, i32
  }
  func.func @transform_4(%arg0: i32) -> (i32, i32) {
    %c0_i32 = arith.constant 0 : i32
    %c0_i32_0 = arith.constant 0 : i32
    return %arg0, %c0_i32 : i32, i32
  }
}

</mosaic_0001>

<llo_original>
// kernel: tpu_custom_call.1
$region0: #{tpu_custom_call.1}
  #allocation0 [shape = 'u32[]', space=smem, size = 0x4, offset = 0x4, fixed_abs, tag = 'smem constant byte address 0x4 - core index']
  #allocation1 [shape = 'u32[144,128]{1,0:T(1,128)}', space=vmem, size = 0x12000, scoped, tag = 'internal scratch']
  %s0 = inlined_call_operand.hbm [shape: bf16[384,128], index: 0, kind: input, shape index: {}]
  %s1 = inlined_call_operand.hbm [shape: bf16[128,128], index: 1, kind: input, shape index: {}]
  %s2 = inlined_call_operand.hbm [shape: bf16[128,128], index: 2, kind: input, shape index: {}]
  %s3 = inlined_call_operand.hbm [shape: bf16[128,128], index: 3, kind: input, shape index: {}]
  %s4 = inlined_call_operand.hbm [shape: f32[384,128], index: 4, kind: output, shape index: {}]
  %s5 = sld [smem:[#allocation0]]
  $region65: #{tpu_custom_call.1} parent=0
    _
  %s7 = ssub.s32 1, %s5
  %s8 = scalar_select 0, %s7, %s5
  $region1: #{tpu_custom_call.1} parent=0
    #allocation2 [shape = 'u8[131072]{0}', space=vmem, size = 0x20000, scoped, tag = 'input window, operand 0']
    #allocation3 [shape = 's32[2]{0}', space=sflag, size = 0x8, scoped, tag = 'scoped memory for tpu_custom_call.1']
    #allocation4 [shape = 's32[2]{0}', space=sflag, size = 0x8, scoped, tag = 'scoped memory for tpu_custom_call.1']
    #allocation5 [shape = 'u8[32768]{0}', space=vmem, size = 0x8000, scoped, tag = 'input window, operand 1, single buffered']
    #allocation6 [shape = 's32[1]{0}', space=sflag, size = 0x4, scoped, tag = 'scoped memory for tpu_custom_call.1']
    #allocation7 [shape = 'u8[32768]{0}', space=vmem, size = 0x8000, scoped, tag = 'input window, operand 2, single buffered']
    #allocation8 [shape = 'u8[32768]{0}', space=vmem, size = 0x8000, scoped, tag = 'input window, operand 3, single buffered']
    #allocation9 [shape = 's32[1]{0}', space=sflag, size = 0x4, scoped, tag = 'scoped memory for tpu_custom_call.1']
    #allocation10 [shape = 'u8[262144]{0}', space=vmem, size = 0x40000, scoped, tag = 'output window, operand 0']
    %9 = vsyncpa [#allocation3], 0
    %s10 = scalar_lea.sflag [#allocation3], 1
    %11 = vsyncpa %s10, 0
    %12 = vsyncpa [#allocation6], 0
    %13 = vsyncpa [#allocation9], 0
    %14 = vsyncpa [#allocation4], 0
    %s15 = scalar_lea.sflag [#allocation4], 1
    %16 = vsyncpa %s15, 0
    loop: start=0, step=1, limit=4
    $region2: #{tpu_custom_call.1} parent=1 // loop_pre_header
      _
    $region3: #{tpu_custom_call.1} parent=1 // loop_header
      %s18 = sphi 0, %s22
      %p19 = scmp.ge.s32.totalorder %s18, 4
      %s28 = sphi 0, %s30
      %s31 = sphi 0, %s28
      %s32 = sphi 0, %s31
      %s48 = sphi 0, %s32
      %s52 = sphi 0, %s52
      %s54 = sphi 0, %s52
      %s55 = sphi 0, %s54
      %s69 = sphi 0, %s55
      %s73 = sphi 0, %s73
      %s75 = sphi 0, %s73
      %s76 = sphi 0, %s75
      %s90 = sphi 0, %s76
      %s94 = sphi 0, %s94
      %s96 = sphi 0, %s94
      %s97 = sphi 0, %s96
      %s111 = sphi 0, %s97
      %s117 = sphi 0, %s119
      %s120 = sphi 0, %s117
      %s121 = sphi 0, %s120
      %s137 = sphi 0, %s121
    $region4: #{tpu_custom_call.1} parent=1 // loop_header_branch
      %21 = sbr.rel (%p19) target = $region8
    $region5: #{tpu_custom_call.1} parent=1 // loop_body
      %s23 = ssub.s32 %s18, 1
      %s24 = ssub.s32 %s18, 2
      %s25 = sadd.s32 %s18, 1
      %s26 = ssub.s32 %s18, %s25
      %p27 = scmp.eq.s32.totalorder %s26, 0
      %s29 = sadd.s32 %s28, 1
      %s30 = scalar_select %p27, %s28, %s29
      %p33 = pneg %p27
      %p34 = scmp.eq.s32.totalorder %s18, 1
      %p35 = por %p33, %p34
      %p36 = scmp.ne.s32.totalorder %s28, %s31
      %p37 = scmp.eq.s32.totalorder %s18, 0
      %p38 = por %p36, %p37
      %p39 = scmp.ne.s32.totalorder %s28, %s31
      %p40 = scmp.eq.s32.totalorder %s23, 1
      %p41 = por %p39, %p40
      %p42 = scmp.ne.s32.totalorder %s31, %s32
      %p43 = scmp.eq.s32.totalorder %s23, 0
      %p44 = por %p42, %p43
      %p45 = scmp.ne.s32.totalorder %s31, %s32
      %p46 = scmp.eq.s32.totalorder %s24, 1
      %p47 = por %p45, %p46
      %p49 = scmp.ne.s32.totalorder %s32, %s48
      %p50 = scmp.eq.s32.totalorder %s24, 0
      %p51 = por %p49, %p50
      %s53 = sadd.s32 %s52, 1
      %p56 = scmp.eq.s32.totalorder %s18, 1
      %p57 = scmp.ne.s32.totalorder %s52, %s54
      %p58 = scmp.eq.s32.totalorder %s18, 0
      %p59 = por %p57, %p58
      %p60 = scmp.ne.s32.totalorder %s52, %s54
      %p61 = scmp.eq.s32.totalorder %s23, 1
      %p62 = por %p60, %p61
      %p63 = scmp.ne.s32.totalorder %s54, %s55
      %p64 = scmp.eq.s32.totalorder %s23, 0
      %p65 = por %p63, %p64
      %p66 = scmp.ne.s32.totalorder %s54, %s55
      %p67 = scmp.eq.s32.totalorder %s24, 1
      %p68 = por %p66, %p67
      %p70 = scmp.ne.s32.totalorder %s55, %s69
      %p71 = scmp.eq.s32.totalorder %s24, 0
      %p72 = por %p70, %p71
      %s74 = sadd.s32 %s73, 1
      %p77 = scmp.eq.s32.totalorder %s18, 1
      %p78 = scmp.ne.s32.totalorder %s73, %s75
      %p79 = scmp.eq.s32.totalorder %s18, 0
      %p80 = por %p78, %p79
      %p81 = scmp.ne.s32.totalorder %s73, %s75
      %p82 = scmp.eq.s32.totalorder %s23, 1
      %p83 = por %p81, %p82
      %p84 = scmp.ne.s32.totalorder %s75, %s76
      %p85 = scmp.eq.s32.totalorder %s23, 0
      %p86 = por %p84, %p85
      %p87 = scmp.ne.s32.totalorder %s75, %s76
      %p88 = scmp.eq.s32.totalorder %s24, 1
      %p89 = por %p87, %p88
      %p91 = scmp.ne.s32.totalorder %s76, %s90
      %p92 = scmp.eq.s32.totalorder %s24, 0
      %p93 = por %p91, %p92
      %s95 = sadd.s32 %s94, 1
      %p98 = scmp.eq.s32.totalorder %s18, 1
      %p99 = scmp.ne.s32.totalorder %s94, %s96
      %p100 = scmp.eq.s32.totalorder %s18, 0
      %p101 = por %p99, %p100
      %p102 = scmp.ne.s32.totalorder %s94, %s96
      %p103 = scmp.eq.s32.totalorder %s23, 1
      %p104 = por %p102, %p103
      %p105 = scmp.ne.s32.totalorder %s96, %s97
      %p106 = scmp.eq.s32.totalorder %s23, 0
      %p107 = por %p105, %p106
      %p108 = scmp.ne.s32.totalorder %s96, %s97
      %p109 = scmp.eq.s32.totalorder %s24, 1
      %p110 = por %p108, %p109
      %p112 = scmp.ne.s32.totalorder %s97, %s111
      %p113 = scmp.eq.s32.totalorder %s24, 0
      %p114 = por %p112, %p113
      %s115 = ssub.s32 %s18, %s25
      %p116 = scmp.eq.s32.totalorder %s115, 0
      %s118 = sadd.s32 %s117, 1
      %s119 = scalar_select %p116, %s117, %s118
      %p122 = pneg %p116
      %p123 = scmp.eq.s32.totalorder %s18, 1
      %p124 = por %p122, %p123
      %p125 = scmp.ne.s32.totalorder %s117, %s120
      %p126 = scmp.eq.s32.totalorder %s18, 0
      %p127 = por %p125, %p126
      %p128 = scmp.ne.s32.totalorder %s117, %s120
      %p129 = scmp.eq.s32.totalorder %s23, 1
      %p130 = por %p128, %p129
      %p131 = scmp.ne.s32.totalorder %s120, %s121
      %p132 = scmp.eq.s32.totalorder %s23, 0
      %p133 = por %p131, %p132
      %p134 = scmp.ne.s32.totalorder %s120, %s121
      %p135 = scmp.eq.s32.totalorder %s24, 1
      %p136 = por %p134, %p135
      %p138 = scmp.ne.s32.totalorder %s121, %s137
      %p139 = scmp.eq.s32.totalorder %s24, 0
      %p140 = por %p138, %p139
      %p141 = scmp.le.s32.totalorder 1, %s18
      %p142 = scmp.lt.s32.totalorder %s18, 3
      %p143 = pnand %p141, %p142
      %p144 = pneg %p143
      // Predicated region
      $region9: #{tpu_custom_call.1} parent=5 // pred_check
        _
      $region10: #{tpu_custom_call.1} parent=5 // pred_check_branch
        %146 = sbr.rel (%p143) target = $region12
      $region11: #{tpu_custom_call.1} parent=5 // pred_region
        %s147 = ssub.s32 %s18, 1
        // Predicated region
        $region13: #{tpu_custom_call.1} parent=11 // pred_check
          %p148 = pneg %p65
        $region14: #{tpu_custom_call.1} parent=11 // pred_check_branch
          %150 = sbr.rel (%p148) target = $region16
        $region15: #{tpu_custom_call.1} parent=11 // pred_region
          %s152 = ssub.s32 1024, 1024
          %153 = vsyncadd [#allocation6], %s152
          %s154 = sshll.u32 [#allocation5], 4
          %s155 = int_to_ptr.vmem [resolvable:$true] %s154
          %160 = dma.hbm_to_vmem [thread:$0]  %s1, 1024, %s155, [#allocation6], 64, 64, 4
        $region16: #{tpu_custom_call.1} parent=11 // pred_fallthru
          _
        // Predicated region
        $region17: #{tpu_custom_call.1} parent=11 // pred_check
          %p161 = pneg %p86
        $region18: #{tpu_custom_call.1} parent=11 // pred_check_branch
          %163 = sbr.rel (%p161) target = $region20
        $region19: #{tpu_custom_call.1} parent=11 // pred_region
          %s165 = ssub.s32 1024, 1024
          %166 = vsyncadd [#allocation6], %s165
          %s167 = sshll.u32 [#allocation7], 4
          %s168 = int_to_ptr.vmem [resolvable:$true] %s167
          %173 = dma.hbm_to_vmem [thread:$0]  %s2, 1024, %s168, [#allocation6], 64, 64, 4
        $region20: #{tpu_custom_call.1} parent=11 // pred_fallthru
          _
        // Predicated region
        $region21: #{tpu_custom_call.1} parent=11 // pred_check
          %p174 = pneg %p107
        $region22: #{tpu_custom_call.1} parent=11 // pred_check_branch
          %176 = sbr.rel (%p174) target = $region24
        $region23: #{tpu_custom_call.1} parent=11 // pred_region
          %s178 = ssub.s32 1024, 1024
          %179 = vsyncadd [#allocation9], %s178
          %s180 = sshll.u32 [#allocation8], 4
          %s181 = int_to_ptr.vmem [resolvable:$true] %s180
          %186 = dma.hbm_to_vmem [thread:$0]  %s3, 1024, %s181, [#allocation9], 64, 64, 4
        $region24: #{tpu_custom_call.1} parent=11 // pred_fallthru
          _
      $region12: #{tpu_custom_call.1} parent=5 // pred_fallthru
        _
      %p187 = scmp.lt.s32.totalorder %s18, 2
      // Predicated region
      $region25: #{tpu_custom_call.1} parent=5 // pred_check
        %p188 = pneg %p187
      $region26: #{tpu_custom_call.1} parent=5 // pred_check_branch
        %190 = sbr.rel (%p188) target = $region28
      $region27: #{tpu_custom_call.1} parent=5 // pred_region
        // Predicated region
        $region29: #{tpu_custom_call.1} parent=27 // pred_check
          %p191 = pneg %p38
        $region30: #{tpu_custom_call.1} parent=27 // pred_check_branch
          %193 = sbr.rel (%p191) target = $region32
        $region31: #{tpu_custom_call.1} parent=27 // pred_region
          %s194 = sand.u32 %s28, 1
          %s195 = scalar_lea.sflag [#allocation3], %s194
          %s196 = sand.u32 %s28, 1
          %s197 = smul.addr %s196, 128
          %s198 = scalar_lea.vmem [#allocation2], %s197
          %s199 = smul.u32 32, %s18
          %s200 = ssub.s32 48, %s199
          %p201 = scmp.lt.s32.totalorder %s200, 32
          %s202 = scalar_select %p201, %s200, 32
          %s203 = smul.u32 64, %s202
          %s205 = ssub.s32 2048, %s203
          %206 = vsyncadd %s195, %s205
          %p207 = scmp.ne.s32.totalorder 0, %s203
          %s208 = smul.addr %s199, 64
          %s209 = scalar_lea.hbm %s0, %s208
          %s210 = smul.u32 4, %s202
          %s211 = sshll.u32 %s198, 4
          %s212 = int_to_ptr.vmem [resolvable:$true] %s211
          %s213 = sshll.u32 %s210, 4
          %217 = dma.hbm_to_vmem [thread:$0]  (%p207), %s209, %s213, %s212, %s195, 64, 64, 4
        $region32: #{tpu_custom_call.1} parent=27 // pred_fallthru
          _
      $region28: #{tpu_custom_call.1} parent=5 // pred_fallthru
        _
      %p218 = scmp.le.s32.totalorder 1, %s18
      %p219 = scmp.lt.s32.totalorder %s18, 3
      %p220 = pnand %p218, %p219
      %p221 = pneg %p220
      // Predicated region
      $region33: #{tpu_custom_call.1} parent=5 // pred_check
        _
      $region34: #{tpu_custom_call.1} parent=5 // pred_check_branch
        %223 = sbr.rel (%p220) target = $region36
      $region35: #{tpu_custom_call.1} parent=5 // pred_region
        %s224 = ssub.s32 %s18, 1
        %s225 = sand.u32 %s31, 1
        %s226 = scalar_lea.sflag [#allocation3], %s225
        %s227 = sand.u32 %s31, 1
        %s228 = smul.addr %s227, 128
        %s229 = scalar_lea.vmem [#allocation2], %s228
        // Predicated region
        $region37: #{tpu_custom_call.1} parent=35 // pred_check
          %p230 = pneg %p44
        $region38: #{tpu_custom_call.1} parent=35 // pred_check_branch
          %232 = sbr.rel (%p230) target = $region40
        $region39: #{tpu_custom_call.1} parent=35 // pred_region
          %233 = dma.done %s226, 2048
        $region40: #{tpu_custom_call.1} parent=35 // pred_fallthru
          _
        // Predicated region
        $region41: #{tpu_custom_call.1} parent=35 // pred_check
          %p234 = pneg %p65
        $region42: #{tpu_custom_call.1} parent=35 // pred_check_branch
          %236 = sbr.rel (%p234) target = $region44
        $region43: #{tpu_custom_call.1} parent=35 // pred_region
          %237 = dma.done [#allocation6], 1024
        $region44: #{tpu_custom_call.1} parent=35 // pred_fallthru
          _
        // Predicated region
        $region45: #{tpu_custom_call.1} parent=35 // pred_check
          %p238 = pneg %p86
        $region46: #{tpu_custom_call.1} parent=35 // pred_check_branch
          %240 = sbr.rel (%p238) target = $region48
        $region47: #{tpu_custom_call.1} parent=35 // pred_region
          %241 = dma.done [#allocation6], 1024
        $region48: #{tpu_custom_call.1} parent=35 // pred_fallthru
          _
        // Predicated region
        $region49: #{tpu_custom_call.1} parent=35 // pred_check
          %p242 = pneg %p107
        $region50: #{tpu_custom_call.1} parent=35 // pred_check_branch
          %244 = sbr.rel (%p242) target = $region52
        $region51: #{tpu_custom_call.1} parent=35 // pred_region
          %245 = dma.done [#allocation9], 1024
        $region52: #{tpu_custom_call.1} parent=35 // pred_fallthru
          _
        %s246 = sand.u32 %s31, 1
        %s247 = scalar_lea.sflag [#allocation3], %s246
        %s248 = sand.u32 %s31, 1
        %s249 = smul.addr %s248, 128
        %s250 = scalar_lea.vmem [#allocation2], %s249
        %p251 = pneg %p44
        %p252 = pneg %p41
        %p253 = pneg %p65
        %p254 = pneg %p62
        %p255 = pneg %p86
        %p256 = pneg %p83
        %p257 = pneg %p107
        %p258 = pneg %p104
        %p259 = pneg %p133
        %p260 = pneg %p130
        %s261 = sand.u32 %s120, 1
        %s262 = scalar_lea.sflag [#allocation4], %s261
        %s263 = sand.u32 %s120, 1
        %s264 = smul.addr %s263, 256
        %s265 = scalar_lea.vmem [#allocation10], %s264
        %s266 = smul.u32 32, %s23
        %s267 = ssub.s32 48, %s266
        %p268 = scmp.lt.s32.totalorder %s267, 32
        %s269 = scalar_select %p268, %s267, 32
        %s270 = smul.u32 64, %s269
        %s271 = smul.u32 32, %s23
        %s272 = ssub.s32 48, %s271
        %p273 = scmp.lt.s32.totalorder %s272, 32
        %s274 = scalar_select %p273, %s272, 32
        %s275 = smul.u32 128, %s274
        %v277 = vld [vmem:[%s229] sm:$0xf]
        %v278 = vld [vmem:[%s229 + $0x4] sm:$0xf]
        %v279 = vld [vmem:[%s229 + $0x8] sm:$0xf]
        %v280 = vld [vmem:[%s229 + $0xc] sm:$0xf]
        %v281 = vld [vmem:[%s229 + $0x10] sm:$0xf]
        %v282 = vld [vmem:[%s229 + $0x14] sm:$0xf]
        %v283 = vld [vmem:[%s229 + $0x18] sm:$0xf]
        %v284 = vld [vmem:[%s229 + $0x1c] sm:$0xf]
        %v285 = vld [vmem:[%s229 + $0x20] sm:$0xf]
        %v286 = vld [vmem:[%s229 + $0x24] sm:$0xf]
        %v287 = vld [vmem:[%s229 + $0x28] sm:$0xf]
        %v288 = vld [vmem:[%s229 + $0x2c] sm:$0xf]
        %v289 = vld [vmem:[%s229 + $0x30] sm:$0xf]
        %v290 = vld [vmem:[%s229 + $0x34] sm:$0xf]
        %v291 = vld [vmem:[%s229 + $0x38] sm:$0xf]
        %v292 = vld [vmem:[%s229 + $0x3c] sm:$0xf]
        %v293 = vld [vmem:[%s229 + $0x40] sm:$0xf]
        %v294 = vld [vmem:[%s229 + $0x44] sm:$0xf]
        %v295 = vld [vmem:[%s229 + $0x48] sm:$0xf]
        %v296 = vld [vmem:[%s229 + $0x4c] sm:$0xf]
        %v297 = vld [vmem:[%s229 + $0x50] sm:$0xf]
        %v298 = vld [vmem:[%s229 + $0x54] sm:$0xf]
        %v299 = vld [vmem:[%s229 + $0x58] sm:$0xf]
        %v300 = vld [vmem:[%s229 + $0x5c] sm:$0xf]
        %v301 = vld [vmem:[%s229 + $0x60] sm:$0xf]
        %v302 = vld [vmem:[%s229 + $0x64] sm:$0xf]
        %v303 = vld [vmem:[%s229 + $0x68] sm:$0xf]
        %v304 = vld [vmem:[%s229 + $0x6c] sm:$0xf]
        %v305 = vld [vmem:[%s229 + $0x70] sm:$0xf]
        %v306 = vld [vmem:[%s229 + $0x74] sm:$0xf]
        %v307 = vld [vmem:[%s229 + $0x78] sm:$0xf]
        %v308 = vld [vmem:[%s229 + $0x7c] sm:$0xf]
        %v309 = vld [vmem:[#allocation5] sm:$0xf]
        %v310 = vld [vmem:[#allocation5 + $0x4] sm:$0xf]
        %v311 = vld [vmem:[#allocation5 + $0x8] sm:$0xf]
        %v312 = vld [vmem:[#allocation5 + $0xc] sm:$0xf]
        %v313 = vld [vmem:[#allocation5 + $0x10] sm:$0xf]
        %v314 = vld [vmem:[#allocation5 + $0x14] sm:$0xf]
        %v315 = vld [vmem:[#allocation5 + $0x18] sm:$0xf]
        %v316 = vld [vmem:[#allocation5 + $0x1c] sm:$0xf]
        %v317 = vld [vmem:[#allocation5 + $0x20] sm:$0xf]
        %v318 = vld [vmem:[#allocation5 + $0x24] sm:$0xf]
        %v319 = vld [vmem:[#allocation5 + $0x28] sm:$0xf]
        %v320 = vld [vmem:[#allocation5 + $0x2c] sm:$0xf]
        %v321 = vld [vmem:[#allocation5 + $0x30] sm:$0xf]
        %v322 = vld [vmem:[#allocation5 + $0x34] sm:$0xf]
        %v323 = vld [vmem:[#allocation5 + $0x38] sm:$0xf]
        %v324 = vld [vmem:[#allocation5 + $0x3c] sm:$0xf]
        %v357 = vunpack.c.l.b16 %v277
        %v358 = vunpack.c.l.b16 %v278
        %v359 = vunpack.c.l.b16 %v279
        %v360 = vunpack.c.l.b16 %v280
        %v361 = vunpack.c.l.b16 %v281
        %v362 = vunpack.c.l.b16 %v282
        %v363 = vunpack.c.l.b16 %v283
        %v364 = vunpack.c.l.b16 %v284
        %v365 = vunpack.c.l.b16 %v285
        %v366 = vunpack.c.l.b16 %v286
        %v367 = vunpack.c.l.b16 %v287
        %v368 = vunpack.c.l.b16 %v288
        %v369 = vunpack.c.l.b16 %v289
        %v370 = vunpack.c.l.b16 %v290
        %v371 = vunpack.c.l.b16 %v291
        %v372 = vunpack.c.l.b16 %v292
        %v373 = vunpack.c.l.b16 %v293
        %v374 = vunpack.c.l.b16 %v294
        %v375 = vunpack.c.l.b16 %v295
        %v376 = vunpack.c.l.b16 %v296
        %v377 = vunpack.c.l.b16 %v297
        %v378 = vunpack.c.l.b16 %v298
        %v379 = vunpack.c.l.b16 %v299
        %v380 = vunpack.c.l.b16 %v300
        %v381 = vunpack.c.l.b16 %v301
        %v382 = vunpack.c.l.b16 %v302
        %v383 = vunpack.c.l.b16 %v303
        %v384 = vunpack.c.l.b16 %v304
        %v385 = vunpack.c.l.b16 %v305
        %v386 = vunpack.c.l.b16 %v306
        %v387 = vunpack.c.l.b16 %v307
        %v388 = vunpack.c.l.b16 %v308
        %v389 = vpack.c.b16 %v358, %v357
        %v390 = vpack.c.b16 %v360, %v359
        %v391 = vpack.c.b16 %v362, %v361
        %v392 = vpack.c.b16 %v364, %v363
        %v393 = vpack.c.b16 %v366, %v365
        %v394 = vpack.c.b16 %v368, %v367
        %v395 = vpack.c.b16 %v370, %v369
        %v396 = vpack.c.b16 %v372, %v371
        %v397 = vpack.c.b16 %v374, %v373
        %v398 = vpack.c.b16 %v376, %v375
        %v399 = vpack.c.b16 %v378, %v377
        %v400 = vpack.c.b16 %v380, %v379
        %v401 = vpack.c.b16 %v382, %v381
        %v402 = vpack.c.b16 %v384, %v383
        %v403 = vpack.c.b16 %v386, %v385
        %v404 = vpack.c.b16 %v388, %v387
        %v437 = vunpack.c.l.b16 %v309
        %v438 = vunpack.c.l.b16 %v310
        %v439 = vunpack.c.l.b16 %v311
        %v440 = vunpack.c.l.b16 %v312
        %v441 = vunpack.c.l.b16 %v313
        %v442 = vunpack.c.l.b16 %v314
        %v443 = vunpack.c.l.b16 %v315
        %v444 = vunpack.c.l.b16 %v316
        %v445 = vunpack.c.l.b16 %v317
        %v446 = vunpack.c.l.b16 %v318
        %v447 = vunpack.c.l.b16 %v319
        %v448 = vunpack.c.l.b16 %v320
        %v449 = vunpack.c.l.b16 %v321
        %v450 = vunpack.c.l.b16 %v322
        %v451 = vunpack.c.l.b16 %v323
        %v452 = vunpack.c.l.b16 %v324
        %v453 = vpack.c.b16 %v438, %v437
        %v454 = vpack.c.b16 %v440, %v439
        %v455 = vpack.c.b16 %v442, %v441
        %v456 = vpack.c.b16 %v444, %v443
        %v457 = vpack.c.b16 %v446, %v445
        %v458 = vpack.c.b16 %v448, %v447
        %v459 = vpack.c.b16 %v450, %v449
        %v460 = vpack.c.b16 %v452, %v451
        %469 = vmatprep.subr.bf16.mxu0 0
        %470 = vmatpush1.bf16.msra.mxu0 %v453
        %471 = vmatprep.subr.bf16.mxu0 0
        %472 = vmatpush1.bf16.msra.mxu0 %v454
        %473 = vmatprep.subr.bf16.mxu0 0
        %474 = vmatpush1.bf16.msra.mxu0 %v455
        %475 = vmatprep.subr.bf16.mxu0 0
        %476 = vmatpush1.bf16.msra.mxu0 %v456
        %477 = vmatprep.subr.bf16.mxu0 0
        %478 = vmatpush1.bf16.msra.mxu0 %v457
        %479 = vmatprep.subr.bf16.mxu0 0
        %480 = vmatpush1.bf16.msra.mxu0 %v458
        %481 = vmatprep.subr.bf16.mxu0 0
        %482 = vmatpush1.bf16.msra.mxu0 %v459
        %483 = vmatprep.subr.bf16.mxu0 0
        %484 = vmatpush1.bf16.msra.mxu0 %v460
        %485 = vmatprep.subr.bf16.mxu0 0
        %486 = vmatpush1.bf16.msra.mxu0 0
        %487 = vmatprep.subr.bf16.mxu0 0
        %488 = vmatpush1.bf16.msra.mxu0 0
        %489 = vmatprep.subr.bf16.mxu0 0
        %490 = vmatpush1.bf16.msra.mxu0 0
        %491 = vmatprep.subr.bf16.mxu0 0
        %492 = vmatpush1.bf16.msra.mxu0 0
        %493 = vmatprep.subr.bf16.mxu0 0
        %494 = vmatpush1.bf16.msra.mxu0 0
        %495 = vmatprep.subr.bf16.mxu0 0
        %496 = vmatpush1.bf16.msra.mxu0 0
        %497 = vmatprep.subr.bf16.mxu0 0
        %498 = vmatpush1.bf16.msra.mxu0 0
        %499 = vmatprep.subr.bf16.mxu0 0
        %500 = vmatpush1.bf16.msra.mxu0 0
        %501 = vmatprep.mubr.bf16.mxu0 0
        %502 = vmatmul.mubr.bf16.gmra.mrb[0].mxu0 %v389
        %v503 = vpop.f32.mrb[0].mxu0
        %v504 = vadd.f32 0.0, %v503
        %v505 = vpop.f32.mrb[0].mxu0
        %v506 = vpop.f32.mrb[0].mxu0
        %v507 = vadd.f32 0.0, %v506
        %v508 = vpop.f32.mrb[0].mxu0
        %509 = vmatprep.mubr.bf16.mxu0 0
        %510 = vmatmul.mubr.bf16.gmra.mrb[0].mxu0 %v390
        %v511 = vpop.f32.mrb[0].mxu0
        %v512 = vadd.f32 0.0, %v511
        %v513 = vpop.f32.mrb[0].mxu0
        %v514 = vpop.f32.mrb[0].mxu0
        %v515 = vadd.f32 0.0, %v514
        %v516 = vpop.f32.mrb[0].mxu0
        %517 = vmatprep.mubr.bf16.mxu0 0
        %518 = vmatmul.mubr.bf16.gmra.mrb[0].mxu0 %v391
        %v519 = vpop.f32.mrb[0].mxu0
        %v520 = vadd.f32 0.0, %v519
        %v521 = vpop.f32.mrb[0].mxu0
        %v522 = vpop.f32.mrb[0].mxu0
        %v523 = vadd.f32 0.0, %v522
        %v524 = vpop.f32.mrb[0].mxu0
        %525 = vmatprep.mubr.bf16.mxu0 0
        %526 = vmatmul.mubr.bf16.gmra.mrb[0].mxu0 %v392
        %v527 = vpop.f32.mrb[0].mxu0
        %v528 = vadd.f32 0.0, %v527
        %v529 = vpop.f32.mrb[0].mxu0
        %v530 = vpop.f32.mrb[0].mxu0
        %v531 = vadd.f32 0.0, %v530
        %v532 = vpop.f32.mrb[0].mxu0
        %533 = vmatprep.mubr.bf16.mxu0 0
        %534 = vmatmul.mubr.bf16.gmra.mrb[0].mxu0 %v393
        %v535 = vpop.f32.mrb[0].mxu0
        %v536 = vadd.f32 0.0, %v535
        %v537 = vpop.f32.mrb[0].mxu0
        %v538 = vpop.f32.mrb[0].mxu0
        %v539 = vadd.f32 0.0, %v538
        %v540 = vpop.f32.mrb[0].mxu0
        %541 = vmatprep.mubr.bf16.mxu0 0
        %542 = vmatmul.mubr.bf16.gmra.mrb[0].mxu0 %v394
        %v543 = vpop.f32.mrb[0].mxu0
        %v544 = vadd.f32 0.0, %v543
        %v545 = vpop.f32.mrb[0].mxu0
        %v546 = vpop.f32.mrb[0].mxu0
        %v547 = vadd.f32 0.0, %v546
        %v548 = vpop.f32.mrb[0].mxu0
        %549 = vmatprep.mubr.bf16.mxu0 0
        %550 = vmatmul.mubr.bf16.gmra.mrb[0].mxu0 %v395
        %v551 = vpop.f32.mrb[0].mxu0
        %v552 = vadd.f32 0.0, %v551
        %v553 = vpop.f32.mrb[0].mxu0
        %v554 = vpop.f32.mrb[0].mxu0
        %v555 = vadd.f32 0.0, %v554
        %v556 = vpop.f32.mrb[0].mxu0
        %557 = vmatprep.mubr.bf16.mxu0 0
        %558 = vmatmul.mubr.bf16.gmra.mrb[0].mxu0 %v396
        %v559 = vpop.f32.mrb[0].mxu0
        %v560 = vadd.f32 0.0, %v559
        %v561 = vpop.f32.mrb[0].mxu0
        %v562 = vpop.f32.mrb[0].mxu0
        %v563 = vadd.f32 0.0, %v562
        %v564 = vpop.f32.mrb[0].mxu0
        %565 = vmatprep.mubr.bf16.mxu0 0
        %566 = vmatmul.mubr.bf16.gmra.mrb[0].mxu0 %v397
        %v567 = vpop.f32.mrb[0].mxu0
        %v568 = vadd.f32 0.0, %v567
        %v569 = vpop.f32.mrb[0].mxu0
        %v570 = vpop.f32.mrb[0].mxu0
        %v571 = vadd.f32 0.0, %v570
        %v572 = vpop.f32.mrb[0].mxu0
        %573 = vmatprep.mubr.bf16.mxu0 0
        %574 = vmatmul.mubr.bf16.gmra.mrb[0].mxu0 %v398
        %v575 = vpop.f32.mrb[0].mxu0
        %v576 = vadd.f32 0.0, %v575
        %v577 = vpop.f32.mrb[0].mxu0
        %v578 = vpop.f32.mrb[0].mxu0
        %v579 = vadd.f32 0.0, %v578
        %v580 = vpop.f32.mrb[0].mxu0
        %581 = vmatprep.mubr.bf16.mxu0 0
        %582 = vmatmul.mubr.bf16.gmra.mrb[0].mxu0 %v399
        %v583 = vpop.f32.mrb[0].mxu0
        %v584 = vadd.f32 0.0, %v583
        %v585 = vpop.f32.mrb[0].mxu0
        %v586 = vpop.f32.mrb[0].mxu0
        %v587 = vadd.f32 0.0, %v586
        %v588 = vpop.f32.mrb[0].mxu0
        %589 = vmatprep.mubr.bf16.mxu0 0
        %590 = vmatmul.mubr.bf16.gmra.mrb[0].mxu0 %v400
        %v591 = vpop.f32.mrb[0].mxu0
        %v592 = vadd.f32 0.0, %v591
        %v593 = vpop.f32.mrb[0].mxu0
        %v594 = vpop.f32.mrb[0].mxu0
        %v595 = vadd.f32 0.0, %v594
        %v596 = vpop.f32.mrb[0].mxu0
        %597 = vmatprep.mubr.bf16.mxu0 0
        %598 = vmatmul.mubr.bf16.gmra.mrb[0].mxu0 %v401
        %v599 = vpop.f32.mrb[0].mxu0
        %v600 = vadd.f32 0.0, %v599
        %v601 = vpop.f32.mrb[0].mxu0
        %v602 = vpop.f32.mrb[0].mxu0
        %v603 = vadd.f32 0.0, %v602
        %v604 = vpop.f32.mrb[0].mxu0
        %605 = vmatprep.mubr.bf16.mxu0 0
        %606 = vmatmul.mubr.bf16.gmra.mrb[0].mxu0 %v402
        %v607 = vpop.f32.mrb[0].mxu0
        %v608 = vadd.f32 0.0, %v607
        %v609 = vpop.f32.mrb[0].mxu0
        %v610 = vpop.f32.mrb[0].mxu0
        %v611 = vadd.f32 0.0, %v610
        %v612 = vpop.f32.mrb[0].mxu0
        %613 = vmatprep.mubr.bf16.mxu0 0
        %614 = vmatmul.mubr.bf16.gmra.mrb[0].mxu0 %v403
        %v615 = vpop.f32.mrb[0].mxu0
        %v616 = vadd.f32 0.0, %v615
        %v617 = vpop.f32.mrb[0].mxu0
        %v618 = vpop.f32.mrb[0].mxu0
        %v619 = vadd.f32 0.0, %v618
        %v620 = vpop.f32.mrb[0].mxu0
        %621 = vmatprep.mubr.bf16.mxu0 0
        %622 = vmatmul.mubr.bf16.gmra.mrb[0].mxu0 %v404
        %v623 = vpop.f32.mrb[0].mxu0
        %v624 = vadd.f32 0.0, %v623
        %v625 = vpop.f32.mrb[0].mxu0
        %v626 = vpop.f32.mrb[0].mxu0
        %v627 = vadd.f32 0.0, %v626
        %v628 = vpop.f32.mrb[0].mxu0
        %629 = vdwg.mxu0
        %v630 = vmax.f32 %v504, 0.0
        %v631 = vmax.f32 %v507, 0.0
        %v632 = vmax.f32 %v512, 0.0
        %v633 = vmax.f32 %v515, 0.0
        %v634 = vmax.f32 %v520, 0.0
        %v635 = vmax.f32 %v523, 0.0
        %v636 = vmax.f32 %v528, 0.0
        %v637 = vmax.f32 %v531, 0.0
        %v638 = vmax.f32 %v536, 0.0
        %v639 = vmax.f32 %v539, 0.0
        %v640 = vmax.f32 %v544, 0.0
        %v641 = vmax.f32 %v547, 0.0
        %v642 = vmax.f32 %v552, 0.0
        %v643 = vmax.f32 %v555, 0.0
        %v644 = vmax.f32 %v560, 0.0
        %v645 = vmax.f32 %v563, 0.0
        %v646 = vmax.f32 %v568, 0.0
        %v647 = vmax.f32 %v571, 0.0
        %v648 = vmax.f32 %v576, 0.0
        %v649 = vmax.f32 %v579, 0.0
        %v650 = vmax.f32 %v584, 0.0
        %v651 = vmax.f32 %v587, 0.0
        %v652 = vmax.f32 %v592, 0.0
        %v653 = vmax.f32 %v595, 0.0
        %v654 = vmax.f32 %v600, 0.0
        %v655 = vmax.f32 %v603, 0.0
        %v656 = vmax.f32 %v608, 0.0
        %v657 = vmax.f32 %v611, 0.0
        %v658 = vmax.f32 %v616, 0.0
        %v659 = vmax.f32 %v619, 0.0
        %v660 = vmax.f32 %v624, 0.0
        %v661 = vmax.f32 %v627, 0.0
        %v662 = vpack.c.bf16 %v631, %v630
        %v663 = vpack.c.bf16 %v633, %v632
        %v664 = vpack.c.bf16 %v635, %v634
        %v665 = vpack.c.bf16 %v637, %v636
        %v666 = vpack.c.bf16 %v639, %v638
        %v667 = vpack.c.bf16 %v641, %v640
        %v668 = vpack.c.bf16 %v643, %v642
        %v669 = vpack.c.bf16 %v645, %v644
        %v670 = vpack.c.bf16 %v647, %v646
        %v671 = vpack.c.bf16 %v649, %v648
        %v672 = vpack.c.bf16 %v651, %v650
        %v673 = vpack.c.bf16 %v653, %v652
        %v674 = vpack.c.bf16 %v655, %v654
        %v675 = vpack.c.bf16 %v657, %v656
        %v676 = vpack.c.bf16 %v659, %v658
        %v677 = vpack.c.bf16 %v661, %v660
        %v678 = vld [vmem:[#allocation7] sm:$0xf]
        %v679 = vld [vmem:[#allocation7 + $0x4] sm:$0xf]
        %v680 = vld [vmem:[#allocation7 + $0x8] sm:$0xf]
        %v681 = vld [vmem:[#allocation7 + $0xc] sm:$0xf]
        %v682 = vld [vmem:[#allocation7 + $0x10] sm:$0xf]
        %v683 = vld [vmem:[#allocation7 + $0x14] sm:$0xf]
        %v684 = vld [vmem:[#allocation7 + $0x18] sm:$0xf]
        %v685 = vld [vmem:[#allocation7 + $0x1c] sm:$0xf]
        %v686 = vld [vmem:[#allocation7 + $0x20] sm:$0xf]
        %v687 = vld [vmem:[#allocation7 + $0x24] sm:$0xf]
        %v688 = vld [vmem:[#allocation7 + $0x28] sm:$0xf]
        %v689 = vld [vmem:[#allocation7 + $0x2c] sm:$0xf]
        %v690 = vld [vmem:[#allocation7 + $0x30] sm:$0xf]
        %v691 = vld [vmem:[#allocation7 + $0x34] sm:$0xf]
        %v692 = vld [vmem:[#allocation7 + $0x38] sm:$0xf]
        %v693 = vld [vmem:[#allocation7 + $0x3c] sm:$0xf]
        %v710 = vunpack.c.l.b16 %v678
        %v711 = vunpack.c.l.b16 %v679
        %v712 = vunpack.c.l.b16 %v680
        %v713 = vunpack.c.l.b16 %v681
        %v714 = vunpack.c.l.b16 %v682
        %v715 = vunpack.c.l.b16 %v683
        %v716 = vunpack.c.l.b16 %v684
        %v717 = vunpack.c.l.b16 %v685
        %v718 = vunpack.c.l.b16 %v686
        %v719 = vunpack.c.l.b16 %v687
        %v720 = vunpack.c.l.b16 %v688
        %v721 = vunpack.c.l.b16 %v689
        %v722 = vunpack.c.l.b16 %v690
        %v723 = vunpack.c.l.b16 %v691
        %v724 = vunpack.c.l.b16 %v692
        %v725 = vunpack.c.l.b16 %v693
        %v726 = vpack.c.b16 %v711, %v710
        %v727 = vpack.c.b16 %v713, %v712
        %v728 = vpack.c.b16 %v715, %v714
        %v729 = vpack.c.b16 %v717, %v716
        %v730 = vpack.c.b16 %v719, %v718
        %v731 = vpack.c.b16 %v721, %v720
        %v732 = vpack.c.b16 %v723, %v722
        %v733 = vpack.c.b16 %v725, %v724
        %742 = vmatprep.subr.bf16.mxu0 0
        %743 = vmatpush1.bf16.msra.mxu0 %v726
        %744 = vmatprep.subr.bf16.mxu0 0
        %745 = vmatpush1.bf16.msra.mxu0 %v727
        %746 = vmatprep.subr.bf16.mxu0 0
        %747 = vmatpush1.bf16.msra.mxu0 %v728
        %748 = vmatprep.subr.bf16.mxu0 0
        %749 = vmatpush1.bf16.msra.mxu0 %v729
        %750 = vmatprep.subr.bf16.mxu0 0
        %751 = vmatpush1.bf16.msra.mxu0 %v730
        %752 = vmatprep.subr.bf16.mxu0 0
        %753 = vmatpush1.bf16.msra.mxu0 %v731
        %754 = vmatprep.subr.bf16.mxu0 0
        %755 = vmatpush1.bf16.msra.mxu0 %v732
        %756 = vmatprep.subr.bf16.mxu0 0
        %757 = vmatpush1.bf16.msra.mxu0 %v733
        %758 = vmatprep.subr.bf16.mxu0 0
        %759 = vmatpush1.bf16.msra.mxu0 0
        %760 = vmatprep.subr.bf16.mxu0 0
        %761 = vmatpush1.bf16.msra.mxu0 0
        %762 = vmatprep.subr.bf16.mxu0 0
        %763 = vmatpush1.bf16.msra.mxu0 0
        %764 = vmatprep.subr.bf16.mxu0 0
        %765 = vmatpush1.bf16.msra.mxu0 0
        %766 = vmatprep.subr.bf16.mxu0 0
        %767 = vmatpush1.bf16.msra.mxu0 0
        %768 = vmatprep.subr.bf16.mxu0 0
        %769 = vmatpush1.bf16.msra.mxu0 0
        %770 = vmatprep.subr.bf16.mxu0 0
        %771 = vmatpush1.bf16.msra.mxu0 0
        %772 = vmatprep.subr.bf16.mxu0 0
        %773 = vmatpush1.bf16.msra.mxu0 0
        %774 = vmatprep.mubr.bf16.mxu0 0
        %775 = vmatmul.mubr.bf16.gmra.mrb[0].mxu0 %v662
        %v776 = vpop.f32.mrb[0].mxu0
        %v777 = vadd.f32 0.0, %v776
        %v778 = vpop.f32.mrb[0].mxu0
        %v779 = vpop.f32.mrb[0].mxu0
        %v780 = vadd.f32 0.0, %v779
        %v781 = vpop.f32.mrb[0].mxu0
        %782 = vmatprep.mubr.bf16.mxu0 0
        %783 = vmatmul.mubr.bf16.gmra.mrb[0].mxu0 %v663
        %v784 = vpop.f32.mrb[0].mxu0
        %v785 = vadd.f32 0.0, %v784
        %v786 = vpop.f32.mrb[0].mxu0
        %v787 = vpop.f32.mrb[0].mxu0
        %v788 = vadd.f32 0.0, %v787
        %v789 = vpop.f32.mrb[0].mxu0
        %790 = vmatprep.mubr.bf16.mxu0 0
        %791 = vmatmul.mubr.bf16.gmra.mrb[0].mxu0 %v664
        %v792 = vpop.f32.mrb[0].mxu0
        %v793 = vadd.f32 0.0, %v792
        %v794 = vpop.f32.mrb[0].mxu0
        %v795 = vpop.f32.mrb[0].mxu0
        %v796 = vadd.f32 0.0, %v795
        %v797 = vpop.f32.mrb[0].mxu0
        %798 = vmatprep.mubr.bf16.mxu0 0
        %799 = vmatmul.mubr.bf16.gmra.mrb[0].mxu0 %v665
        %v800 = vpop.f32.mrb[0].mxu0
        %v801 = vadd.f32 0.0, %v800
        %v802 = vpop.f32.mrb[0].mxu0
        %v803 = vpop.f32.mrb[0].mxu0
        %v804 = vadd.f32 0.0, %v803
        %v805 = vpop.f32.mrb[0].mxu0
        %806 = vmatprep.mubr.bf16.mxu0 0
        %807 = vmatmul.mubr.bf16.gmra.mrb[0].mxu0 %v666
        %v808 = vpop.f32.mrb[0].mxu0
        %v809 = vadd.f32 0.0, %v808
        %v810 = vpop.f32.mrb[0].mxu0
        %v811 = vpop.f32.mrb[0].mxu0
        %v812 = vadd.f32 0.0, %v811
        %v813 = vpop.f32.mrb[0].mxu0
        %814 = vmatprep.mubr.bf16.mxu0 0
        %815 = vmatmul.mubr.bf16.gmra.mrb[0].mxu0 %v667
        %v816 = vpop.f32.mrb[0].mxu0
        %v817 = vadd.f32 0.0, %v816
        %v818 = vpop.f32.mrb[0].mxu0
        %v819 = vpop.f32.mrb[0].mxu0
        %v820 = vadd.f32 0.0, %v819
        %v821 = vpop.f32.mrb[0].mxu0
        %822 = vmatprep.mubr.bf16.mxu0 0
        %823 = vmatmul.mubr.bf16.gmra.mrb[0].mxu0 %v668
        %v824 = vpop.f32.mrb[0].mxu0
        %v825 = vadd.f32 0.0, %v824
        %v826 = vpop.f32.mrb[0].mxu0
        %v827 = vpop.f32.mrb[0].mxu0
        %v828 = vadd.f32 0.0, %v827
        %v829 = vpop.f32.mrb[0].mxu0
        %830 = vmatprep.mubr.bf16.mxu0 0
        %831 = vmatmul.mubr.bf16.gmra.mrb[0].mxu0 %v669
        %v832 = vpop.f32.mrb[0].mxu0
        %v833 = vadd.f32 0.0, %v832
        %v834 = vpop.f32.mrb[0].mxu0
        %v835 = vpop.f32.mrb[0].mxu0
        %v836 = vadd.f32 0.0, %v835
        %v837 = vpop.f32.mrb[0].mxu0
        %838 = vmatprep.mubr.bf16.mxu0 0
        %839 = vmatmul.mubr.bf16.gmra.mrb[0].mxu0 %v670
        %v840 = vpop.f32.mrb[0].mxu0
        %v841 = vadd.f32 0.0, %v840
        %v842 = vpop.f32.mrb[0].mxu0
        %v843 = vpop.f32.mrb[0].mxu0
        %v844 = vadd.f32 0.0, %v843
        %v845 = vpop.f32.mrb[0].mxu0
        %846 = vmatprep.mubr.bf16.mxu0 0
        %847 = vmatmul.mubr.bf16.gmra.mrb[0].mxu0 %v671
        %v848 = vpop.f32.mrb[0].mxu0
        %v849 = vadd.f32 0.0, %v848
        %v850 = vpop.f32.mrb[0].mxu0
        %v851 = vpop.f32.mrb[0].mxu0
        %v852 = vadd.f32 0.0, %v851
        %v853 = vpop.f32.mrb[0].mxu0
        %854 = vmatprep.mubr.bf16.mxu0 0
        %855 = vmatmul.mubr.bf16.gmra.mrb[0].mxu0 %v672
        %v856 = vpop.f32.mrb[0].mxu0
        %v857 = vadd.f32 0.0, %v856
        %v858 = vpop.f32.mrb[0].mxu0
        %v859 = vpop.f32.mrb[0].mxu0
        %v860 = vadd.f32 0.0, %v859
        %v861 = vpop.f32.mrb[0].mxu0
        %862 = vmatprep.mubr.bf16.mxu0 0
        %863 = vmatmul.mubr.bf16.gmra.mrb[0].mxu0 %v673
        %v864 = vpop.f32.mrb[0].mxu0
        %v865 = vadd.f32 0.0, %v864
        %v866 = vpop.f32.mrb[0].mxu0
        %v867 = vpop.f32.mrb[0].mxu0
        %v868 = vadd.f32 0.0, %v867
        %v869 = vpop.f32.mrb[0].mxu0
        %870 = vmatprep.mubr.bf16.mxu0 0
        %871 = vmatmul.mubr.bf16.gmra.mrb[0].mxu0 %v674
        %v872 = vpop.f32.mrb[0].mxu0
        %v873 = vadd.f32 0.0, %v872
        %v874 = vpop.f32.mrb[0].mxu0
        %v875 = vpop.f32.mrb[0].mxu0
        %v876 = vadd.f32 0.0, %v875
        %v877 = vpop.f32.mrb[0].mxu0
        %878 = vmatprep.mubr.bf16.mxu0 0
        %879 = vmatmul.mubr.bf16.gmra.mrb[0].mxu0 %v675
        %v880 = vpop.f32.mrb[0].mxu0
        %v881 = vadd.f32 0.0, %v880
        %v882 = vpop.f32.mrb[0].mxu0
        %v883 = vpop.f32.mrb[0].mxu0
        %v884 = vadd.f32 0.0, %v883
        %v885 = vpop.f32.mrb[0].mxu0
        %886 = vmatprep.mubr.bf16.mxu0 0
        %887 = vmatmul.mubr.bf16.gmra.mrb[0].mxu0 %v676
        %v888 = vpop.f32.mrb[0].mxu0
        %v889 = vadd.f32 0.0, %v888
        %v890 = vpop.f32.mrb[0].mxu0
        %v891 = vpop.f32.mrb[0].mxu0
        %v892 = vadd.f32 0.0, %v891
        %v893 = vpop.f32.mrb[0].mxu0
        %894 = vmatprep.mubr.bf16.mxu0 0
        %895 = vmatmul.mubr.bf16.gmra.mrb[0].mxu0 %v677
        %v896 = vpop.f32.mrb[0].mxu0
        %v897 = vadd.f32 0.0, %v896
        %v898 = vpop.f32.mrb[0].mxu0
        %v899 = vpop.f32.mrb[0].mxu0
        %v900 = vadd.f32 0.0, %v899
        %v901 = vpop.f32.mrb[0].mxu0
        %902 = vdwg.mxu0
        %v903 = vmax.f32 %v777, 0.0
        %v904 = vmax.f32 %v780, 0.0
        %v905 = vmax.f32 %v785, 0.0
        %v906 = vmax.f32 %v788, 0.0
        %v907 = vmax.f32 %v793, 0.0
        %v908 = vmax.f32 %v796, 0.0
        %v909 = vmax.f32 %v801, 0.0
        %v910 = vmax.f32 %v804, 0.0
        %v911 = vmax.f32 %v809, 0.0
        %v912 = vmax.f32 %v812, 0.0
        %v913 = vmax.f32 %v817, 0.0
        %v914 = vmax.f32 %v820, 0.0
        %v915 = vmax.f32 %v825, 0.0
        %v916 = vmax.f32 %v828, 0.0
        %v917 = vmax.f32 %v833, 0.0
        %v918 = vmax.f32 %v836, 0.0
        %v919 = vmax.f32 %v841, 0.0
        %v920 = vmax.f32 %v844, 0.0
        %v921 = vmax.f32 %v849, 0.0
        %v922 = vmax.f32 %v852, 0.0
        %v923 = vmax.f32 %v857, 0.0
        %v924 = vmax.f32 %v860, 0.0
        %v925 = vmax.f32 %v865, 0.0
        %v926 = vmax.f32 %v868, 0.0
        %v927 = vmax.f32 %v873, 0.0
        %v928 = vmax.f32 %v876, 0.0
        %v929 = vmax.f32 %v881, 0.0
        %v930 = vmax.f32 %v884, 0.0
        %v931 = vmax.f32 %v889, 0.0
        %v932 = vmax.f32 %v892, 0.0
        %v933 = vmax.f32 %v897, 0.0
        %v934 = vmax.f32 %v900, 0.0
        %v935 = vpack.c.bf16 %v904, %v903
        %v936 = vpack.c.bf16 %v906, %v905
        %v937 = vpack.c.bf16 %v908, %v907
        %v938 = vpack.c.bf16 %v910, %v909
        %v939 = vpack.c.bf16 %v912, %v911
        %v940 = vpack.c.bf16 %v914, %v913
        %v941 = vpack.c.bf16 %v916, %v915
        %v942 = vpack.c.bf16 %v918, %v917
        %v943 = vpack.c.bf16 %v920, %v919
        %v944 = vpack.c.bf16 %v922, %v921
        %v945 = vpack.c.bf16 %v924, %v923
        %v946 = vpack.c.bf16 %v926, %v925
        %v947 = vpack.c.bf16 %v928, %v927
        %v948 = vpack.c.bf16 %v930, %v929
        %v949 = vpack.c.bf16 %v932, %v931
        %v950 = vpack.c.bf16 %v934, %v933
        %v951 = vld [vmem:[#allocation8] sm:$0xf]
        %v952 = vld [vmem:[#allocation8 + $0x4] sm:$0xf]
        %v953 = vld [vmem:[#allocation8 + $0x8] sm:$0xf]
        %v954 = vld [vmem:[#allocation8 + $0xc] sm:$0xf]
        %v955 = vld [vmem:[#allocation8 + $0x10] sm:$0xf]
        %v956 = vld [vmem:[#allocation8 + $0x14] sm:$0xf]
        %v957 = vld [vmem:[#allocation8 + $0x18] sm:$0xf]
        %v958 = vld [vmem:[#allocation8 + $0x1c] sm:$0xf]
        %v959 = vld [vmem:[#allocation8 + $0x20] sm:$0xf]
        %v960 = vld [vmem:[#allocation8 + $0x24] sm:$0xf]
        %v961 = vld [vmem:[#allocation8 + $0x28] sm:$0xf]
        %v962 = vld [vmem:[#allocation8 + $0x2c] sm:$0xf]
        %v963 = vld [vmem:[#allocation8 + $0x30] sm:$0xf]
        %v964 = vld [vmem:[#allocation8 + $0x34] sm:$0xf]
        %v965 = vld [vmem:[#allocation8 + $0x38] sm:$0xf]
        %v966 = vld [vmem:[#allocation8 + $0x3c] sm:$0xf]
        %v983 = vunpack.c.l.b16 %v951
        %v984 = vunpack.c.l.b16 %v952
        %v985 = vunpack.c.l.b16 %v953
        %v986 = vunpack.c.l.b16 %v954
        %v987 = vunpack.c.l.b16 %v955
        %v988 = vunpack.c.l.b16 %v956
        %v989 = vunpack.c.l.b16 %v957
        %v990 = vunpack.c.l.b16 %v958
        %v991 = vunpack.c.l.b16 %v959
        %v992 = vunpack.c.l.b16 %v960
        %v993 = vunpack.c.l.b16 %v961
        %v994 = vunpack.c.l.b16 %v962
        %v995 = vunpack.c.l.b16 %v963
        %v996 = vunpack.c.l.b16 %v964
        %v997 = vunpack.c.l.b16 %v965
        %v998 = vunpack.c.l.b16 %v966
        %v999 = vpack.c.b16 %v984, %v983
        %v1000 = vpack.c.b16 %v986, %v985
        %v1001 = vpack.c.b16 %v988, %v987
        %v1002 = vpack.c.b16 %v990, %v989
        %v1003 = vpack.c.b16 %v992, %v991
        %v1004 = vpack.c.b16 %v994, %v993
        %v1005 = vpack.c.b16 %v996, %v995
        %v1006 = vpack.c.b16 %v998, %v997
        %1015 = vmatprep.subr.bf16.mxu0 0
        %1016 = vmatpush1.bf16.msra.mxu0 %v999
        %1017 = vmatprep.subr.bf16.mxu0 0
        %1018 = vmatpush1.bf16.msra.mxu0 %v1000
        %1019 = vmatprep.subr.bf16.mxu0 0
        %1020 = vmatpush1.bf16.msra.mxu0 %v1001
        %1021 = vmatprep.subr.bf16.mxu0 0
        %1022 = vmatpush1.bf16.msra.mxu0 %v1002
        %1023 = vmatprep.subr.bf16.mxu0 0
        %1024 = vmatpush1.bf16.msra.mxu0 %v1003
        %1025 = vmatprep.subr.bf16.mxu0 0
        %1026 = vmatpush1.bf16.msra.mxu0 %v1004
        %1027 = vmatprep.subr.bf16.mxu0 0
        %1028 = vmatpush1.bf16.msra.mxu0 %v1005
        %1029 = vmatprep.subr.bf16.mxu0 0
        %1030 = vmatpush1.bf16.msra.mxu0 %v1006
        %1031 = vmatprep.subr.bf16.mxu0 0
        %1032 = vmatpush1.bf16.msra.mxu0 0
        %1033 = vmatprep.subr.bf16.mxu0 0
        %1034 = vmatpush1.bf16.msra.mxu0 0
        %1035 = vmatprep.subr.bf16.mxu0 0
        %1036 = vmatpush1.bf16.msra.mxu0 0
        %1037 = vmatprep.subr.bf16.mxu0 0
        %1038 = vmatpush1.bf16.msra.mxu0 0
        %1039 = vmatprep.subr.bf16.mxu0 0
        %1040 = vmatpush1.bf16.msra.mxu0 0
        %1041 = vmatprep.subr.bf16.mxu0 0
        %1042 = vmatpush1.bf16.msra.mxu0 0
        %1043 = vmatprep.subr.bf16.mxu0 0
        %1044 = vmatpush1.bf16.msra.mxu0 0
        %1045 = vmatprep.subr.bf16.mxu0 0
        %1046 = vmatpush1.bf16.msra.mxu0 0
        %1047 = vmatprep.mubr.bf16.mxu0 0
        %1048 = vmatmul.mubr.bf16.gmra.mrb[0].mxu0 %v935
        %v1049 = vpop.f32.mrb[0].mxu0
        %v1050 = vadd.f32 0.0, %v1049
        %v1051 = vpop.f32.mrb[0].mxu0
        %v1052 = vpop.f32.mrb[0].mxu0
        %v1053 = vadd.f32 0.0, %v1052
        %v1054 = vpop.f32.mrb[0].mxu0
        %1055 = vmatprep.mubr.bf16.mxu0 0
        %1056 = vmatmul.mubr.bf16.gmra.mrb[0].mxu0 %v936
        %v1057 = vpop.f32.mrb[0].mxu0
        %v1058 = vadd.f32 0.0, %v1057
        %v1059 = vpop.f32.mrb[0].mxu0
        %v1060 = vpop.f32.mrb[0].mxu0
        %v1061 = vadd.f32 0.0, %v1060
        %v1062 = vpop.f32.mrb[0].mxu0
        %1063 = vmatprep.mubr.bf16.mxu0 0
        %1064 = vmatmul.mubr.bf16.gmra.mrb[0].mxu0 %v937
        %v1065 = vpop.f32.mrb[0].mxu0
        %v1066 = vadd.f32 0.0, %v1065
        %v1067 = vpop.f32.mrb[0].mxu0
        %v1068 = vpop.f32.mrb[0].mxu0
        %v1069 = vadd.f32 0.0, %v1068
        %v1070 = vpop.f32.mrb[0].mxu0
        %1071 = vmatprep.mubr.bf16.mxu0 0
        %1072 = vmatmul.mubr.bf16.gmra.mrb[0].mxu0 %v938
        %v1073 = vpop.f32.mrb[0].mxu0
        %v1074 = vadd.f32 0.0, %v1073
        %v1075 = vpop.f32.mrb[0].mxu0
        %v1076 = vpop.f32.mrb[0].mxu0
        %v1077 = vadd.f32 0.0, %v1076
        %v1078 = vpop.f32.mrb[0].mxu0
        %1079 = vmatprep.mubr.bf16.mxu0 0
        %1080 = vmatmul.mubr.bf16.gmra.mrb[0].mxu0 %v939
        %v1081 = vpop.f32.mrb[0].mxu0
        %v1082 = vadd.f32 0.0, %v1081
        %v1083 = vpop.f32.mrb[0].mxu0
        %v1084 = vpop.f32.mrb[0].mxu0
        %v1085 = vadd.f32 0.0, %v1084
        %v1086 = vpop.f32.mrb[0].mxu0
        %1087 = vmatprep.mubr.bf16.mxu0 0
        %1088 = vmatmul.mubr.bf16.gmra.mrb[0].mxu0 %v940
        %v1089 = vpop.f32.mrb[0].mxu0
        %v1090 = vadd.f32 0.0, %v1089
        %v1091 = vpop.f32.mrb[0].mxu0
        %v1092 = vpop.f32.mrb[0].mxu0
        %v1093 = vadd.f32 0.0, %v1092
        %v1094 = vpop.f32.mrb[0].mxu0
        %1095 = vmatprep.mubr.bf16.mxu0 0
        %1096 = vmatmul.mubr.bf16.gmra.mrb[0].mxu0 %v941
        %v1097 = vpop.f32.mrb[0].mxu0
        %v1098 = vadd.f32 0.0, %v1097
        %v1099 = vpop.f32.mrb[0].mxu0
        %v1100 = vpop.f32.mrb[0].mxu0
        %v1101 = vadd.f32 0.0, %v1100
        %v1102 = vpop.f32.mrb[0].mxu0
        %1103 = vmatprep.mubr.bf16.mxu0 0
        %1104 = vmatmul.mubr.bf16.gmra.mrb[0].mxu0 %v942
        %v1105 = vpop.f32.mrb[0].mxu0
        %v1106 = vadd.f32 0.0, %v1105
        %v1107 = vpop.f32.mrb[0].mxu0
        %v1108 = vpop.f32.mrb[0].mxu0
        %v1109 = vadd.f32 0.0, %v1108
        %v1110 = vpop.f32.mrb[0].mxu0
        %1111 = vmatprep.mubr.bf16.mxu0 0
        %1112 = vmatmul.mubr.bf16.gmra.mrb[0].mxu0 %v943
        %v1113 = vpop.f32.mrb[0].mxu0
        %v1114 = vadd.f32 0.0, %v1113
        %v1115 = vpop.f32.mrb[0].mxu0
        %v1116 = vpop.f32.mrb[0].mxu0
        %v1117 = vadd.f32 0.0, %v1116
        %v1118 = vpop.f32.mrb[0].mxu0
        %1119 = vmatprep.mubr.bf16.mxu0 0
        %1120 = vmatmul.mubr.bf16.gmra.mrb[0].mxu0 %v944
        %v1121 = vpop.f32.mrb[0].mxu0
        %v1122 = vadd.f32 0.0, %v1121
        %v1123 = vpop.f32.mrb[0].mxu0
        %v1124 = vpop.f32.mrb[0].mxu0
        %v1125 = vadd.f32 0.0, %v1124
        %v1126 = vpop.f32.mrb[0].mxu0
        %1127 = vmatprep.mubr.bf16.mxu0 0
        %1128 = vmatmul.mubr.bf16.gmra.mrb[0].mxu0 %v945
        %v1129 = vpop.f32.mrb[0].mxu0
        %v1130 = vadd.f32 0.0, %v1129
        %v1131 = vpop.f32.mrb[0].mxu0
        %v1132 = vpop.f32.mrb[0].mxu0
        %v1133 = vadd.f32 0.0, %v1132
        %v1134 = vpop.f32.mrb[0].mxu0
        %1135 = vmatprep.mubr.bf16.mxu0 0
        %1136 = vmatmul.mubr.bf16.gmra.mrb[0].mxu0 %v946
        %v1137 = vpop.f32.mrb[0].mxu0
        %v1138 = vadd.f32 0.0, %v1137
        %v1139 = vpop.f32.mrb[0].mxu0
        %v1140 = vpop.f32.mrb[0].mxu0
        %v1141 = vadd.f32 0.0, %v1140
        %v1142 = vpop.f32.mrb[0].mxu0
        %1143 = vmatprep.mubr.bf16.mxu0 0
        %1144 = vmatmul.mubr.bf16.gmra.mrb[0].mxu0 %v947
        %v1145 = vpop.f32.mrb[0].mxu0
        %v1146 = vadd.f32 0.0, %v1145
        %v1147 = vpop.f32.mrb[0].mxu0
        %v1148 = vpop.f32.mrb[0].mxu0
        %v1149 = vadd.f32 0.0, %v1148
        %v1150 = vpop.f32.mrb[0].mxu0
        %1151 = vmatprep.mubr.bf16.mxu0 0
        %1152 = vmatmul.mubr.bf16.gmra.mrb[0].mxu0 %v948
        %v1153 = vpop.f32.mrb[0].mxu0
        %v1154 = vadd.f32 0.0, %v1153
        %v1155 = vpop.f32.mrb[0].mxu0
        %v1156 = vpop.f32.mrb[0].mxu0
        %v1157 = vadd.f32 0.0, %v1156
        %v1158 = vpop.f32.mrb[0].mxu0
        %1159 = vmatprep.mubr.bf16.mxu0 0
        %1160 = vmatmul.mubr.bf16.gmra.mrb[0].mxu0 %v949
        %v1161 = vpop.f32.mrb[0].mxu0
        %v1162 = vadd.f32 0.0, %v1161
        %v1163 = vpop.f32.mrb[0].mxu0
        %v1164 = vpop.f32.mrb[0].mxu0
        %v1165 = vadd.f32 0.0, %v1164
        %v1166 = vpop.f32.mrb[0].mxu0
        %1167 = vmatprep.mubr.bf16.mxu0 0
        %1168 = vmatmul.mubr.bf16.gmra.mrb[0].mxu0 %v950
        %v1169 = vpop.f32.mrb[0].mxu0
        %v1170 = vadd.f32 0.0, %v1169
        %v1171 = vpop.f32.mrb[0].mxu0
        %v1172 = vpop.f32.mrb[0].mxu0
        %v1173 = vadd.f32 0.0, %v1172
        %v1174 = vpop.f32.mrb[0].mxu0
        %1175 = vdwg.mxu0
        %1176 = vst [vmem:[%s265] sm:$0xff] %v1050
        %1177 = vst [vmem:[%s265 + $0x8] sm:$0xff] %v1053
        %1178 = vst [vmem:[%s265 + $0x10] sm:$0xff] %v1058
        %1179 = vst [vmem:[%s265 + $0x18] sm:$0xff] %v1061
        %1180 = vst [vmem:[%s265 + $0x20] sm:$0xff] %v1066
        %1181 = vst [vmem:[%s265 + $0x28] sm:$0xff] %v1069
        %1182 = vst [vmem:[%s265 + $0x30] sm:$0xff] %v1074
        %1183 = vst [vmem:[%s265 + $0x38] sm:$0xff] %v1077
        %1184 = vst [vmem:[%s265 + $0x40] sm:$0xff] %v1082
        %1185 = vst [vmem:[%s265 + $0x48] sm:$0xff] %v1085
        %1186 = vst [vmem:[%s265 + $0x50] sm:$0xff] %v1090
        %1187 = vst [vmem:[%s265 + $0x58] sm:$0xff] %v1093
        %1188 = vst [vmem:[%s265 + $0x60] sm:$0xff] %v1098
        %1189 = vst [vmem:[%s265 + $0x68] sm:$0xff] %v1101
        %1190 = vst [vmem:[%s265 + $0x70] sm:$0xff] %v1106
        %1191 = vst [vmem:[%s265 + $0x78] sm:$0xff] %v1109
        %1192 = vst [vmem:[%s265 + $0x80] sm:$0xff] %v1114
        %1193 = vst [vmem:[%s265 + $0x88] sm:$0xff] %v1117
        %1194 = vst [vmem:[%s265 + $0x90] sm:$0xff] %v1122
        %1195 = vst [vmem:[%s265 + $0x98] sm:$0xff] %v1125
        %1196 = vst [vmem:[%s265 + $0xa0] sm:$0xff] %v1130
        %1197 = vst [vmem:[%s265 + $0xa8] sm:$0xff] %v1133
        %1198 = vst [vmem:[%s265 + $0xb0] sm:$0xff] %v1138
        %1199 = vst [vmem:[%s265 + $0xb8] sm:$0xff] %v1141
        %1200 = vst [vmem:[%s265 + $0xc0] sm:$0xff] %v1146
        %1201 = vst [vmem:[%s265 + $0xc8] sm:$0xff] %v1149
        %1202 = vst [vmem:[%s265 + $0xd0] sm:$0xff] %v1154
        %1203 = vst [vmem:[%s265 + $0xd8] sm:$0xff] %v1157
        %1204 = vst [vmem:[%s265 + $0xe0] sm:$0xff] %v1162
        %1205 = vst [vmem:[%s265 + $0xe8] sm:$0xff] %v1165
        %1206 = vst [vmem:[%s265 + $0xf0] sm:$0xff] %v1170
        %1207 = vst [vmem:[%s265 + $0xf8] sm:$0xff] %v1173
        %s1208 = sand.u32 %s120, 1
        %s1209 = scalar_lea.sflag [#allocation4], %s1208
        %s1210 = sand.u32 %s120, 1
        %s1211 = smul.addr %s1210, 256
        %s1212 = scalar_lea.vmem [#allocation10], %s1211
        // Predicated region
        $region53: #{tpu_custom_call.1} parent=35 // pred_check
          %p1213 = pneg %p130
        $region54: #{tpu_custom_call.1} parent=35 // pred_check_branch
          %1215 = sbr.rel (%p1213) target = $region56
        $region55: #{tpu_custom_call.1} parent=35 // pred_region
          %s1216 = smul.u32 32, %s23
          %s1217 = ssub.s32 48, %s1216
          %p1218 = scmp.lt.s32.totalorder %s1217, 32
          %s1219 = scalar_select %p1218, %s1217, 32
          %s1220 = smul.u32 128, %s1219
          %s1222 = ssub.s32 4096, %s1220
          %1223 = vsyncadd %s1209, %s1222
          %p1224 = scmp.ne.s32.totalorder 0, %s1220
          %s1225 = smul.addr %s1216, 128
          %s1226 = scalar_lea.hbm %s4, %s1225
          %s1227 = smul.u32 8, %s1219
          %s1228 = sshll.u32 %s1212, 4
          %s1229 = int_to_ptr.vmem [resolvable:$true] %s1228
          %s1230 = sshll.u32 %s1227, 4
          %1234 = dma.vmem_to_hbm [thread:$0]  (%p1224), %s1229, %s1230, %s1226, %s1209, 128, 128, 8
        $region56: #{tpu_custom_call.1} parent=35 // pred_fallthru
          _
      $region36: #{tpu_custom_call.1} parent=5 // pred_fallthru
        _
      %p1235 = scmp.le.s32.totalorder 2, %s18
      // Predicated region
      $region57: #{tpu_custom_call.1} parent=5 // pred_check
        %p1236 = pneg %p1235
      $region58: #{tpu_custom_call.1} parent=5 // pred_check_branch
        %1238 = sbr.rel (%p1236) target = $region60
      $region59: #{tpu_custom_call.1} parent=5 // pred_region
        %s1239 = ssub.s32 %s18, 2
        // Predicated region
        $region61: #{tpu_custom_call.1} parent=59 // pred_check
          %p1240 = pneg %p136
        $region62: #{tpu_custom_call.1} parent=59 // pred_check_branch
          %1242 = sbr.rel (%p1240) target = $region64
        $region63: #{tpu_custom_call.1} parent=59 // pred_region
          %s1243 = sand.u32 %s121, 1
          %s1244 = scalar_lea.sflag [#allocation4], %s1243
          %s1245 = sand.u32 %s121, 1
          %s1246 = smul.addr %s1245, 256
          %s1247 = scalar_lea.vmem [#allocation10], %s1246
          %1248 = dma.done %s1244, 4096
        $region64: #{tpu_custom_call.1} parent=59 // pred_fallthru
          _
      $region60: #{tpu_custom_call.1} parent=5 // pred_fallthru
        _
    $region6: #{tpu_custom_call.1} parent=1 // loop_footer
      %s22 = sadd.s32 1, %s18
    $region7: #{tpu_custom_call.1} parent=1 // loop_footer_branch
      %17 = sbr.rel target = $region3
    $region8: #{tpu_custom_call.1} parent=1 // loop_exit
      _
    %1249 = vsyncpa [#allocation3], 1
    %s1250 = scalar_lea.sflag [#allocation3], 1
    %1251 = vsyncpa %s1250, 1
    %1252 = vsyncpa [#allocation6], 1
    %1253 = vsyncpa [#allocation9], 1
    %1254 = vsyncpa [#allocation4], 1
    %s1255 = scalar_lea.sflag [#allocation4], 1
    %1256 = vsyncpa %s1255, 1

</llo_original>
